<compile_context>
chip_gen: v5e
topology: v5e:2x2
jax: 0.10.0
libtpu: 0.0.40
codegen_flags: <defaults>
</compile_context>

<pallas_src>
import math

import jax
import jax.numpy as jnp
from jax.experimental import pallas as pl
from jax.experimental.pallas import tpu as pltpu

NEG_SLOPE = 0.01        # F.leaky_relu default negative_slope
NEG_INF = -1e30         # finite mask sentinel (safe in f32)
_HIGHEST = jax.lax.Precision.HIGHEST


def _round_up(x, m):
    return (x + m - 1) // m * m


# --------------------------------------------------------------------------
# Pass 1: fused projection  zf = h @ [W | W@a_src | W@a_dst | zero-pad]
# --------------------------------------------------------------------------
def _proj_kernel(h_ref, wf_ref, zf_ref):
    zf_ref[...] = jnp.dot(
        h_ref[...], wf_ref[...],
        preferred_element_type=jnp.float32, precision=_HIGHEST,
    ).astype(zf_ref.dtype)


# --------------------------------------------------------------------------
# Pass 2: tiled masked softmax + aggregation (online softmax over src tiles)
#   grid = (n_dst_tiles, n_src_tiles); src axis is the reduction ("arbitrary")
# --------------------------------------------------------------------------
def _attn_kernel(s_dst_ref, s_src_ref, adj_ref, z_ref, out_ref,
                 m_sc, l_sc, acc_sc):
    j = pl.program_id(1)

    @pl.when(j == 0)
    def _init():
        m_sc[...] = jnp.full_like(m_sc, NEG_INF)
        l_sc[...] = jnp.zeros_like(l_sc)
        acc_sc[...] = jnp.zeros_like(acc_sc)

    adj = adj_ref[...].astype(jnp.float32)                 # (Td, Ts) 0/1 mask
    # raw[d, s] = a_dst.z_d + a_src.z_s ; both precomputed -> pure VPU bcast add
    raw = s_dst_ref[...] + s_src_ref[...]                  # (Td,1) + (1,Ts)
    e = jnp.where(raw >= 0.0, raw, NEG_SLOPE * raw)        # leaky_relu
    e_m = jnp.where(adj > 0.0, e, NEG_INF)

    m_prev = m_sc[...]
    m_new = jnp.maximum(m_prev, jnp.max(e_m, axis=1, keepdims=True))
    corr = jnp.exp(m_prev - m_new)
    p = jnp.exp(e_m - m_new) * adj                         # masked entries -> 0
    l_sc[...] = corr * l_sc[...] + jnp.sum(p, axis=1, keepdims=True)
    acc_sc[...] = corr * acc_sc[...] + jnp.dot(
        p, z_ref[...], preferred_element_type=jnp.float32, precision=_HIGHEST)
    m_sc[...] = m_new

    @pl.when(j == pl.num_programs(1) - 1)
    def _finalize():
        # Guard: destination rows with zero in-edges (incl. padding rows)
        # output 0 instead of NaN.  Real rows always have denom >= 1.
        l_safe = jnp.maximum(l_sc[...], 1e-30)
        out_ref[...] = (acc_sc[...] * pl.reciprocal(l_safe, approx=False)
                        ).astype(out_ref.dtype)


# --------------------------------------------------------------------------
# Wrapper
# --------------------------------------------------------------------------
def gat_hetersum_forward(h, adj, fc_weight, attn_weight, *,
                         t_dst=128, t_src=512, t_proj=256):
    """h: (N, in_dim); adj: (N_dst, N_src) 0/1 mask;
    fc_weight: (out_dim, in_dim) as in nn.Linear; attn_weight: (1, 2*out_dim)."""
    n, in_dim = h.shape
    out_dim = fc_weight.shape[0]

    # fused projection width: [ z (out_dim) | s_src | s_dst | zero pad ] -> 128k lanes
    dp = _round_up(out_dim + 2, 128)

    # pad N to tile multiples (lane-dense adj tiles, unmasked output stores)
    n_pad = _round_up(n, 128)
    t_dst = min(t_dst, n_pad)
    t_src = min(t_src, n_pad)
    t_proj = min(t_proj, n_pad)
    n_pad = _round_up(n_pad, math.lcm(t_dst, t_src, t_proj))

    # ---- one-time parameter prep (tiny, O(in_dim * out_dim)) ----
    w = fc_weight.T.astype(jnp.float32)                       # (in, out)
    a_src = attn_weight[0, :out_dim].astype(jnp.float32)      # (out,)
    a_dst = attn_weight[0, out_dim:].astype(jnp.float32)      # (out,)
    wf = jnp.zeros((in_dim, dp), jnp.float32)
    wf = wf.at[:, :out_dim].set(w)
    wf = wf.at[:, out_dim].set(jnp.dot(w, a_src, precision=_HIGHEST))
    wf = wf.at[:, out_dim + 1].set(jnp.dot(w, a_dst, precision=_HIGHEST))

    h_p = jnp.zeros((n_pad, in_dim), jnp.float32).at[:n].set(h.astype(jnp.float32))
    # adjacency as bf16 (0/1 exact): halves HBM/VMEM traffic of the N^2 input
    adj_p = jnp.zeros((n_pad, n_pad), jnp.bfloat16).at[:n, :n].set(
        adj.astype(jnp.bfloat16))

    # ---- pass 1: z / s_src / s_dst from a single lane-dense MXU matmul ----
    zf = pl.pallas_call(
        _proj_kernel,
        out_shape=jax.ShapeDtypeStruct((n_pad, dp), jnp.float32),
        grid_spec=pltpu.PrefetchScalarGridSpec(
            num_scalar_prefetch=0,
            grid=(n_pad // t_proj,),
            in_specs=[pl.BlockSpec((t_proj, in_dim), lambda i: (i, 0)),
                      pl.BlockSpec((in_dim, dp), lambda i: (0, 0))],
            out_specs=pl.BlockSpec((t_proj, dp), lambda i: (i, 0)),
        ),
        compiler_params=pltpu.CompilerParams(
            dimension_semantics=("parallel",)),
    )(h_p, wf)

    # Extract per-source scores lane-major (1, N) and per-destination column
    # (N, 1) once here, so the attention kernel never runs an XLU transpose.
    s_src_row = zf[:, out_dim].reshape(1, n_pad)
    s_dst_col = zf[:, out_dim + 1].reshape(n_pad, 1)

    # ---- pass 2: tiled masked softmax + aggregation (online softmax) ----
    # Note: zf's extra columns (s_src/s_dst/pad) ride through the p @ zf matmul
    # into output columns >= out_dim, which are sliced off below.
    out_p = pl.pallas_call(
        _attn_kernel,
        out_shape=jax.ShapeDtypeStruct((n_pad, dp), jnp.float32),
        grid_spec=pltpu.PrefetchScalarGridSpec(
            num_scalar_prefetch=0,
            grid=(n_pad // t_dst, n_pad // t_src),
            in_specs=[
                pl.BlockSpec((t_dst, 1), lambda i, j: (i, 0)),      # s_dst column
                pl.BlockSpec((1, t_src), lambda i, j: (0, j)),      # s_src row
                pl.BlockSpec((t_dst, t_src), lambda i, j: (i, j)),  # adj tile
                pl.BlockSpec((t_src, dp), lambda i, j: (j, 0)),     # z (src tile)
            ],
            out_specs=pl.BlockSpec((t_dst, dp), lambda i, j: (i, 0)),
            scratch_shapes=[
                pltpu.VMEM((t_dst, 1), jnp.float32),   # running max m
                pltpu.VMEM((t_dst, 1), jnp.float32),   # running denom l
                pltpu.VMEM((t_dst, dp), jnp.float32),  # running numerator acc
            ],
        ),
        compiler_params=pltpu.CompilerParams(
            dimension_semantics=("parallel", "arbitrary")),
    )(s_dst_col, s_src_row, adj_p, zf)

    return out_p[:n, :out_dim].astype(h.dtype)


# --------------------------------------------------------------------------
# Pure-JAX reference mirroring the PyTorch/DGL semantics
# --------------------------------------------------------------------------
def reference_forward(h, adj, fc_weight, attn_weight):
    out_dim = fc_weight.shape[0]
    z = jnp.dot(h, fc_weight.T, precision=_HIGHEST)
    a_src = attn_weight[0, :out_dim]
    a_dst = attn_weight[0, out_dim:]
    raw = (jnp.dot(z, a_dst, precision=_HIGHEST)[:, None]
           + jnp.dot(z, a_src, precision=_HIGHEST)[None, :])   # (dst, src)
    e = jnp.where(raw >= 0.0, raw, NEG_SLOPE * raw)
    mask = adj > 0.0
    e_m = jnp.where(mask, e, -jnp.inf)
    alpha = jax.nn.softmax(e_m, axis=1)
    alpha = jnp.where(mask, alpha, 0.0)
    return jnp.dot(alpha, z, precision=_HIGHEST)


if __name__ == "__main__":
    key = jax.random.PRNGKey(0)
    k_h, k_w, k_a, k_adj = jax.random.split(key, 4)

    N, IN_DIM, OUT_DIM = 8, 16, 8

    h = jax.random.normal(k_h, (N, IN_DIM), dtype=jnp.float32)

    # Parameters (shapes from __init__: Linear(in, out, bias=False) / Linear(2*out, 1, bias=False))
    fc_weight = jax.random.normal(k_w, (OUT_DIM, IN_DIM), dtype=jnp.float32) * 0.1
    attn_weight = jax.random.normal(k_a, (1, 2 * OUT_DIM), dtype=jnp.float32) * 0.1

    # Synthetic graph: random edges + self-loops so every node has an in-edge.
    adj = (jax.random.uniform(k_adj, (N, N)) < 0.4).astype(jnp.float32)
    adj = jnp.maximum(adj, jnp.eye(N, dtype=jnp.float32))

    out = gat_hetersum_forward(h, adj, fc_weight, attn_weight)
    out = jax.block_until_ready(out)

    ref = reference_forward(h, adj, fc_weight, attn_weight)
    assert out.shape == (N, OUT_DIM)
    assert jnp.allclose(out, ref, atol=1e-5, rtol=1e-5), "mismatch vs reference"

    print("KERNEL_OK")
</pallas_src>

<mosaic_0001>
module attributes {stable_mosaic.version = 11 : i64} {
  func.func @_proj_kernel(%arg0: i32, %arg1: memref<128x16xf32, #tpu.memory_space<vmem>>, %arg2: memref<16x128xf32, #tpu.memory_space<vmem>>, %arg3: memref<128x128xf32, #tpu.memory_space<vmem>>) attributes {dimension_semantics = [#tpu.dimension_semantics<parallel>], iteration_bounds = array<i64: 1>, scalar_prefetch = 0 : i64, scratch_operands = 0 : i64, tpu.core_type = #tpu.core_type<tc>, window_params = [{transform_indices = @transform_0, window_bounds = array<i64: 128, 16>}, {pipeline_mode = #tpu.pipeline_mode<synchronous>, transform_indices = @transform_1, window_bounds = array<i64: 16, 128>}, {transform_indices = @transform_2, window_bounds = array<i64: 128, 128>}]} {
    %c0 = arith.constant 0 : index
    %c0_0 = arith.constant 0 : index
    %0 = vector.load %arg1[%c0, %c0_0] : memref<128x16xf32, #tpu.memory_space<vmem>>, vector<128x16xf32>
    %c0_1 = arith.constant 0 : index
    %c0_2 = arith.constant 0 : index
    %1 = vector.load %arg2[%c0_1, %c0_2] : memref<16x128xf32, #tpu.memory_space<vmem>>, vector<16x128xf32>
    %cst = arith.constant dense<0.000000e+00> : vector<128x128xf32>
    %2 = tpu.matmul %0, %1, %cst {dimension_numbers = #tpu.dot_dimension_numbers<[1], [0], [0], [1], [0, 0, 1, 1], [], []>, precision = #tpu.contract_precision<fp32>} : vector<128x16xf32>, vector<16x128xf32>, vector<128x128xf32> -> vector<128x128xf32>
    %c0_3 = arith.constant 0 : index
    %c0_4 = arith.constant 0 : index
    %3 = vector.load %arg3[%c0_3, %c0_4] : memref<128x128xf32, #tpu.memory_space<vmem>>, vector<128x128xf32>
    tpu.vector_store %arg3[%c0_3, %c0_4], %2 {strides = array<i32>} : memref<128x128xf32, #tpu.memory_space<vmem>>, vector<128x128xf32>,
    return
  }
  func.func @transform_0(%arg0: i32) -> (i32, i32) {
    %c0_i32 = arith.constant 0 : i32
    %c0_i32_0 = arith.constant 0 : i32
    return %arg0, %c0_i32 : i32, i32
  }
  func.func @transform_1(%arg0: i32) -> (i32, i32) {
    %c0_i32 = arith.constant 0 : i32
    %c0_i32_0 = arith.constant 0 : i32
    %c0_i32_1 = arith.constant 0 : i32
    return %c0_i32, %c0_i32_0 : i32, i32
  }
  func.func @transform_2(%arg0: i32) -> (i32, i32) {
    %c0_i32 = arith.constant 0 : i32
    %c0_i32_0 = arith.constant 0 : i32
    return %arg0, %c0_i32 : i32, i32
  }
}

</mosaic_0001>

<llo_original>
// kernel: tpu_custom_call.1
$region0: #{tpu_custom_call.1}
  #allocation0 [shape = 'u32[]', space=smem, size = 0x4, offset = 0x4, fixed_abs, tag = 'smem constant byte address 0x4 - core index']
  #allocation1 [shape = 'u32[72,128]{1,0:T(1,128)}', space=vmem, size = 0x9000, scoped, tag = 'internal scratch']
  %s0 = inlined_call_operand.vmem [shape: f32[128,16], index: 0, kind: input, shape index: {}]
  %s1 = inlined_call_operand.vmem [shape: f32[16,128], index: 1, kind: input, shape index: {}]
  %s2 = inlined_call_operand.hbm [shape: f32[128,128], index: 2, kind: output, shape index: {}]
  %s3 = sld [smem:[#allocation0]]
  $region18: #{tpu_custom_call.1} parent=0
    _
  %s5 = ssub.s32 1, %s3
  %s6 = scalar_select 0, %s5, %s3
  $region1: #{tpu_custom_call.1} parent=0
    #allocation2 [shape = 'u8[65536]{0}', space=vmem, size = 0x10000, scoped, tag = 'output window, operand 0, single buffered']
    #allocation3 [shape = 's32[1]{0}', space=sflag, size = 0x4, scoped, tag = 'scoped memory for tpu_custom_call.1']
    %7 = vsyncpa [#allocation3], 0
    // Predicated region
    $region2: #{tpu_custom_call.1} parent=1 // pred_check
      _
    $region3: #{tpu_custom_call.1} parent=1 // pred_check_branch
      %9 = sbr.rel (0) target = $region5
    $region4: #{tpu_custom_call.1} parent=1 // pred_region
      _
    $region5: #{tpu_custom_call.1} parent=1 // pred_fallthru
      _
    // Predicated region
    $region6: #{tpu_custom_call.1} parent=1 // pred_check
      _
    $region7: #{tpu_custom_call.1} parent=1 // pred_check_branch
      %11 = sbr.rel (0) target = $region9
    $region8: #{tpu_custom_call.1} parent=1 // pred_region
      _
    $region9: #{tpu_custom_call.1} parent=1 // pred_fallthru
      _
    %v12 = vld [vmem:[%s0] sm:$0xff]
    %v13 = vld [vmem:[%s0 + $0x8] sm:$0xff]
    %v14 = vld [vmem:[%s0 + $0x10] sm:$0xff]
    %v15 = vld [vmem:[%s0 + $0x18] sm:$0xff]
    %v16 = vld [vmem:[%s0 + $0x20] sm:$0xff]
    %v17 = vld [vmem:[%s0 + $0x28] sm:$0xff]
    %v18 = vld [vmem:[%s0 + $0x30] sm:$0xff]
    %v19 = vld [vmem:[%s0 + $0x38] sm:$0xff]
    %v20 = vld [vmem:[%s0 + $0x40] sm:$0xff]
    %v21 = vld [vmem:[%s0 + $0x48] sm:$0xff]
    %v22 = vld [vmem:[%s0 + $0x50] sm:$0xff]
    %v23 = vld [vmem:[%s0 + $0x58] sm:$0xff]
    %v24 = vld [vmem:[%s0 + $0x60] sm:$0xff]
    %v25 = vld [vmem:[%s0 + $0x68] sm:$0xff]
    %v26 = vld [vmem:[%s0 + $0x70] sm:$0xff]
    %v27 = vld [vmem:[%s0 + $0x78] sm:$0xff]
    %v28 = vld [vmem:[%s1] sm:$0xff]
    %v29 = vld [vmem:[%s1 + $0x8] sm:$0xff]
    %vm30 = vcmask 130048
    %v32 = vsel %vm30, %v12, 0
    %v35 = vsel %vm30, %v13, 0
    %v38 = vsel %vm30, %v14, 0
    %v41 = vsel %vm30, %v15, 0
    %v44 = vsel %vm30, %v16, 0
    %v47 = vsel %vm30, %v17, 0
    %v50 = vsel %vm30, %v18, 0
    %v53 = vsel %vm30, %v19, 0
    %v56 = vsel %vm30, %v20, 0
    %v59 = vsel %vm30, %v21, 0
    %v62 = vsel %vm30, %v22, 0
    %v65 = vsel %vm30, %v23, 0
    %v68 = vsel %vm30, %v24, 0
    %v71 = vsel %vm30, %v25, 0
    %v74 = vsel %vm30, %v26, 0
    %v77 = vsel %vm30, %v27, 0
    %79 = vmatpush.msra.mxu0 0.0
    %80 = vmatpush.msra.mxu0 0.0
    %81 = vmatpush.msra.mxu0 0.0
    %82 = vmatpush.msra.mxu0 0.0
    %83 = vmatpush.msra.mxu0 0.0
    %84 = vmatpush.msra.mxu0 0.0
    %85 = vmatpush.msra.mxu0 0.0
    %86 = vmatpush.msra.mxu0 0.0
    %87 = vmatpush.msra.mxu0 0.0
    %88 = vmatpush.msra.mxu0 0.0
    %89 = vmatpush.msra.mxu0 0.0
    %90 = vmatpush.msra.mxu0 0.0
    %91 = vmatpush.msra.mxu0 0.0
    %92 = vmatpush.msra.mxu0 0.0
    %v93 = vand.u32 %v29, 4294901760
    %94 = vmatpush.msra.mxu0 %v93
    %v95 = vand.u32 %v28, 4294901760
    %96 = vmatpush.msra.mxu0 %v95
    %v97 = vand.u32 %v32, 4294901760
    %v98 = vsub.f32 %v32, %v97
    %v99 = vand.u32 %v98, 4294901760
    %v100 = vsub.f32 %v98, %v99
    %v101 = vand.u32 %v100, 4294901760
    %102 = vmatmul.f32.gmra.mxu0 %v101
    %v103 = vpop.f32.mrf.mxu0
    %v104 = vadd.f32 0.0, %v103
    %v105 = vand.u32 %v35, 4294901760
    %v106 = vsub.f32 %v35, %v105
    %v107 = vand.u32 %v106, 4294901760
    %v108 = vsub.f32 %v106, %v107
    %v109 = vand.u32 %v108, 4294901760
    %110 = vmatmul.f32.gmra.mxu0 %v109
    %v111 = vpop.f32.mrf.mxu0
    %v112 = vadd.f32 0.0, %v111
    %v113 = vand.u32 %v38, 4294901760
    %v114 = vsub.f32 %v38, %v113
    %v115 = vand.u32 %v114, 4294901760
    %v116 = vsub.f32 %v114, %v115
    %v117 = vand.u32 %v116, 4294901760
    %118 = vmatmul.f32.gmra.mxu0 %v117
    %v119 = vpop.f32.mrf.mxu0
    %v120 = vadd.f32 0.0, %v119
    %v121 = vand.u32 %v41, 4294901760
    %v122 = vsub.f32 %v41, %v121
    %v123 = vand.u32 %v122, 4294901760
    %v124 = vsub.f32 %v122, %v123
    %v125 = vand.u32 %v124, 4294901760
    %126 = vmatmul.f32.gmra.mxu0 %v125
    %v127 = vpop.f32.mrf.mxu0
    %v128 = vadd.f32 0.0, %v127
    %v129 = vand.u32 %v44, 4294901760
    %v130 = vsub.f32 %v44, %v129
    %v131 = vand.u32 %v130, 4294901760
    %v132 = vsub.f32 %v130, %v131
    %v133 = vand.u32 %v132, 4294901760
    %134 = vmatmul.f32.gmra.mxu0 %v133
    %v135 = vpop.f32.mrf.mxu0
    %v136 = vadd.f32 0.0, %v135
    %v137 = vand.u32 %v47, 4294901760
    %v138 = vsub.f32 %v47, %v137
    %v139 = vand.u32 %v138, 4294901760
    %v140 = vsub.f32 %v138, %v139
    %v141 = vand.u32 %v140, 4294901760
    %142 = vmatmul.f32.gmra.mxu0 %v141
    %v143 = vpop.f32.mrf.mxu0
    %v144 = vadd.f32 0.0, %v143
    %v145 = vand.u32 %v50, 4294901760
    %v146 = vsub.f32 %v50, %v145
    %v147 = vand.u32 %v146, 4294901760
    %v148 = vsub.f32 %v146, %v147
    %v149 = vand.u32 %v148, 4294901760
    %150 = vmatmul.f32.gmra.mxu0 %v149
    %v151 = vpop.f32.mrf.mxu0
    %v152 = vadd.f32 0.0, %v151
    %v153 = vand.u32 %v53, 4294901760
    %v154 = vsub.f32 %v53, %v153
    %v155 = vand.u32 %v154, 4294901760
    %v156 = vsub.f32 %v154, %v155
    %v157 = vand.u32 %v156, 4294901760
    %158 = vmatmul.f32.gmra.mxu0 %v157
    %v159 = vpop.f32.mrf.mxu0
    %v160 = vadd.f32 0.0, %v159
    %v161 = vand.u32 %v56, 4294901760
    %v162 = vsub.f32 %v56, %v161
    %v163 = vand.u32 %v162, 4294901760
    %v164 = vsub.f32 %v162, %v163
    %v165 = vand.u32 %v164, 4294901760
    %166 = vmatmul.f32.gmra.mxu0 %v165
    %v167 = vpop.f32.mrf.mxu0
    %v168 = vadd.f32 0.0, %v167
    %v169 = vand.u32 %v59, 4294901760
    %v170 = vsub.f32 %v59, %v169
    %v171 = vand.u32 %v170, 4294901760
    %v172 = vsub.f32 %v170, %v171
    %v173 = vand.u32 %v172, 4294901760
    %174 = vmatmul.f32.gmra.mxu0 %v173
    %v175 = vpop.f32.mrf.mxu0
    %v176 = vadd.f32 0.0, %v175
    %v177 = vand.u32 %v62, 4294901760
    %v178 = vsub.f32 %v62, %v177
    %v179 = vand.u32 %v178, 4294901760
    %v180 = vsub.f32 %v178, %v179
    %v181 = vand.u32 %v180, 4294901760
    %182 = vmatmul.f32.gmra.mxu0 %v181
    %v183 = vpop.f32.mrf.mxu0
    %v184 = vadd.f32 0.0, %v183
    %v185 = vand.u32 %v65, 4294901760
    %v186 = vsub.f32 %v65, %v185
    %v187 = vand.u32 %v186, 4294901760
    %v188 = vsub.f32 %v186, %v187
    %v189 = vand.u32 %v188, 4294901760
    %190 = vmatmul.f32.gmra.mxu0 %v189
    %v191 = vpop.f32.mrf.mxu0
    %v192 = vadd.f32 0.0, %v191
    %v193 = vand.u32 %v68, 4294901760
    %v194 = vsub.f32 %v68, %v193
    %v195 = vand.u32 %v194, 4294901760
    %v196 = vsub.f32 %v194, %v195
    %v197 = vand.u32 %v196, 4294901760
    %198 = vmatmul.f32.gmra.mxu0 %v197
    %v199 = vpop.f32.mrf.mxu0
    %v200 = vadd.f32 0.0, %v199
    %v201 = vand.u32 %v71, 4294901760
    %v202 = vsub.f32 %v71, %v201
    %v203 = vand.u32 %v202, 4294901760
    %v204 = vsub.f32 %v202, %v203
    %v205 = vand.u32 %v204, 4294901760
    %206 = vmatmul.f32.gmra.mxu0 %v205
    %v207 = vpop.f32.mrf.mxu0
    %v208 = vadd.f32 0.0, %v207
    %v209 = vand.u32 %v74, 4294901760
    %v210 = vsub.f32 %v74, %v209
    %v211 = vand.u32 %v210, 4294901760
    %v212 = vsub.f32 %v210, %v211
    %v213 = vand.u32 %v212, 4294901760
    %214 = vmatmul.f32.gmra.mxu0 %v213
    %v215 = vpop.f32.mrf.mxu0
    %v216 = vadd.f32 0.0, %v215
    %v217 = vand.u32 %v77, 4294901760
    %v218 = vsub.f32 %v77, %v217
    %v219 = vand.u32 %v218, 4294901760
    %v220 = vsub.f32 %v218, %v219
    %v221 = vand.u32 %v220, 4294901760
    %222 = vmatmul.f32.gmra.mxu0 %v221
    %v223 = vpop.f32.mrf.mxu0
    %v224 = vadd.f32 0.0, %v223
    %225 = vdwg.mxu0
    %226 = vmatpush.msra.mxu0 0.0
    %227 = vmatpush.msra.mxu0 0.0
    %228 = vmatpush.msra.mxu0 0.0
    %229 = vmatpush.msra.mxu0 0.0
    %230 = vmatpush.msra.mxu0 0.0
    %231 = vmatpush.msra.mxu0 0.0
    %232 = vmatpush.msra.mxu0 0.0
    %233 = vmatpush.msra.mxu0 0.0
    %234 = vmatpush.msra.mxu0 0.0
    %235 = vmatpush.msra.mxu0 0.0
    %236 = vmatpush.msra.mxu0 0.0
    %237 = vmatpush.msra.mxu0 0.0
    %238 = vmatpush.msra.mxu0 0.0
    %239 = vmatpush.msra.mxu0 0.0
    %v240 = vand.u32 %v29, 4294901760
    %v241 = vsub.f32 %v29, %v240
    %v242 = vand.u32 %v241, 4294901760
    %v243 = vsub.f32 %v241, %v242
    %v244 = vand.u32 %v243, 4294901760
    %245 = vmatpush.msra.mxu0 %v244
    %v246 = vand.u32 %v28, 4294901760
    %v247 = vsub.f32 %v28, %v246
    %v248 = vand.u32 %v247, 4294901760
    %v249 = vsub.f32 %v247, %v248
    %v250 = vand.u32 %v249, 4294901760
    %251 = vmatpush.msra.mxu0 %v250
    %v252 = vand.u32 %v32, 4294901760
    %253 = vmatmul.f32.gmra.mxu0 %v252
    %v254 = vpop.f32.mrf.mxu0
    %v255 = vadd.f32 %v104, %v254
    %v256 = vand.u32 %v35, 4294901760
    %257 = vmatmul.f32.gmra.mxu0 %v256
    %v258 = vpop.f32.mrf.mxu0
    %v259 = vadd.f32 %v112, %v258
    %v260 = vand.u32 %v38, 4294901760
    %261 = vmatmul.f32.gmra.mxu0 %v260
    %v262 = vpop.f32.mrf.mxu0
    %v263 = vadd.f32 %v120, %v262
    %v264 = vand.u32 %v41, 4294901760
    %265 = vmatmul.f32.gmra.mxu0 %v264
    %v266 = vpop.f32.mrf.mxu0
    %v267 = vadd.f32 %v128, %v266
    %v268 = vand.u32 %v44, 4294901760
    %269 = vmatmul.f32.gmra.mxu0 %v268
    %v270 = vpop.f32.mrf.mxu0
    %v271 = vadd.f32 %v136, %v270
    %v272 = vand.u32 %v47, 4294901760
    %273 = vmatmul.f32.gmra.mxu0 %v272
    %v274 = vpop.f32.mrf.mxu0
    %v275 = vadd.f32 %v144, %v274
    %v276 = vand.u32 %v50, 4294901760
    %277 = vmatmul.f32.gmra.mxu0 %v276
    %v278 = vpop.f32.mrf.mxu0
    %v279 = vadd.f32 %v152, %v278
    %v280 = vand.u32 %v53, 4294901760
    %281 = vmatmul.f32.gmra.mxu0 %v280
    %v282 = vpop.f32.mrf.mxu0
    %v283 = vadd.f32 %v160, %v282
    %v284 = vand.u32 %v56, 4294901760
    %285 = vmatmul.f32.gmra.mxu0 %v284
    %v286 = vpop.f32.mrf.mxu0
    %v287 = vadd.f32 %v168, %v286
    %v288 = vand.u32 %v59, 4294901760
    %289 = vmatmul.f32.gmra.mxu0 %v288
    %v290 = vpop.f32.mrf.mxu0
    %v291 = vadd.f32 %v176, %v290
    %v292 = vand.u32 %v62, 4294901760
    %293 = vmatmul.f32.gmra.mxu0 %v292
    %v294 = vpop.f32.mrf.mxu0
    %v295 = vadd.f32 %v184, %v294
    %v296 = vand.u32 %v65, 4294901760
    %297 = vmatmul.f32.gmra.mxu0 %v296
    %v298 = vpop.f32.mrf.mxu0
    %v299 = vadd.f32 %v192, %v298
    %v300 = vand.u32 %v68, 4294901760
    %301 = vmatmul.f32.gmra.mxu0 %v300
    %v302 = vpop.f32.mrf.mxu0
    %v303 = vadd.f32 %v200, %v302
    %v304 = vand.u32 %v71, 4294901760
    %305 = vmatmul.f32.gmra.mxu0 %v304
    %v306 = vpop.f32.mrf.mxu0
    %v307 = vadd.f32 %v208, %v306
    %v308 = vand.u32 %v74, 4294901760
    %309 = vmatmul.f32.gmra.mxu0 %v308
    %v310 = vpop.f32.mrf.mxu0
    %v311 = vadd.f32 %v216, %v310
    %v312 = vand.u32 %v77, 4294901760
    %313 = vmatmul.f32.gmra.mxu0 %v312
    %v314 = vpop.f32.mrf.mxu0
    %v315 = vadd.f32 %v224, %v314
    %316 = vdwg.mxu0
    %317 = vmatpush.msra.mxu0 0.0
    %318 = vmatpush.msra.mxu0 0.0
    %319 = vmatpush.msra.mxu0 0.0
    %320 = vmatpush.msra.mxu0 0.0
    %321 = vmatpush.msra.mxu0 0.0
    %322 = vmatpush.msra.mxu0 0.0
    %323 = vmatpush.msra.mxu0 0.0
    %324 = vmatpush.msra.mxu0 0.0
    %325 = vmatpush.msra.mxu0 0.0
    %326 = vmatpush.msra.mxu0 0.0
    %327 = vmatpush.msra.mxu0 0.0
    %328 = vmatpush.msra.mxu0 0.0
    %329 = vmatpush.msra.mxu0 0.0
    %330 = vmatpush.msra.mxu0 0.0
    %v331 = vand.u32 %v29, 4294901760
    %v332 = vsub.f32 %v29, %v331
    %333 = vmatpush.msra.mxu0 %v332
    %v334 = vand.u32 %v28, 4294901760
    %v335 = vsub.f32 %v28, %v334
    %336 = vmatpush.msra.mxu0 %v335
    %v337 = vand.u32 %v32, 4294901760
    %v338 = vsub.f32 %v32, %v337
    %339 = vmatmul.f32.gmra.mxu0 %v338
    %v340 = vpop.f32.mrf.mxu0
    %v341 = vadd.f32 %v255, %v340
    %v342 = vand.u32 %v35, 4294901760
    %v343 = vsub.f32 %v35, %v342
    %344 = vmatmul.f32.gmra.mxu0 %v343
    %v345 = vpop.f32.mrf.mxu0
    %v346 = vadd.f32 %v259, %v345
    %v347 = vand.u32 %v38, 4294901760
    %v348 = vsub.f32 %v38, %v347
    %349 = vmatmul.f32.gmra.mxu0 %v348
    %v350 = vpop.f32.mrf.mxu0
    %v351 = vadd.f32 %v263, %v350
    %v352 = vand.u32 %v41, 4294901760
    %v353 = vsub.f32 %v41, %v352
    %354 = vmatmul.f32.gmra.mxu0 %v353
    %v355 = vpop.f32.mrf.mxu0
    %v356 = vadd.f32 %v267, %v355
    %v357 = vand.u32 %v44, 4294901760
    %v358 = vsub.f32 %v44, %v357
    %359 = vmatmul.f32.gmra.mxu0 %v358
    %v360 = vpop.f32.mrf.mxu0
    %v361 = vadd.f32 %v271, %v360
    %v362 = vand.u32 %v47, 4294901760
    %v363 = vsub.f32 %v47, %v362
    %364 = vmatmul.f32.gmra.mxu0 %v363
    %v365 = vpop.f32.mrf.mxu0
    %v366 = vadd.f32 %v275, %v365
    %v367 = vand.u32 %v50, 4294901760
    %v368 = vsub.f32 %v50, %v367
    %369 = vmatmul.f32.gmra.mxu0 %v368
    %v370 = vpop.f32.mrf.mxu0
    %v371 = vadd.f32 %v279, %v370
    %v372 = vand.u32 %v53, 4294901760
    %v373 = vsub.f32 %v53, %v372
    %374 = vmatmul.f32.gmra.mxu0 %v373
    %v375 = vpop.f32.mrf.mxu0
    %v376 = vadd.f32 %v283, %v375
    %v377 = vand.u32 %v56, 4294901760
    %v378 = vsub.f32 %v56, %v377
    %379 = vmatmul.f32.gmra.mxu0 %v378
    %v380 = vpop.f32.mrf.mxu0
    %v381 = vadd.f32 %v287, %v380
    %v382 = vand.u32 %v59, 4294901760
    %v383 = vsub.f32 %v59, %v382
    %384 = vmatmul.f32.gmra.mxu0 %v383
    %v385 = vpop.f32.mrf.mxu0
    %v386 = vadd.f32 %v291, %v385
    %v387 = vand.u32 %v62, 4294901760
    %v388 = vsub.f32 %v62, %v387
    %389 = vmatmul.f32.gmra.mxu0 %v388
    %v390 = vpop.f32.mrf.mxu0
    %v391 = vadd.f32 %v295, %v390
    %v392 = vand.u32 %v65, 4294901760
    %v393 = vsub.f32 %v65, %v392
    %394 = vmatmul.f32.gmra.mxu0 %v393
    %v395 = vpop.f32.mrf.mxu0
    %v396 = vadd.f32 %v299, %v395
    %v397 = vand.u32 %v68, 4294901760
    %v398 = vsub.f32 %v68, %v397
    %399 = vmatmul.f32.gmra.mxu0 %v398
    %v400 = vpop.f32.mrf.mxu0
    %v401 = vadd.f32 %v303, %v400
    %v402 = vand.u32 %v71, 4294901760
    %v403 = vsub.f32 %v71, %v402
    %404 = vmatmul.f32.gmra.mxu0 %v403
    %v405 = vpop.f32.mrf.mxu0
    %v406 = vadd.f32 %v307, %v405
    %v407 = vand.u32 %v74, 4294901760
    %v408 = vsub.f32 %v74, %v407
    %409 = vmatmul.f32.gmra.mxu0 %v408
    %v410 = vpop.f32.mrf.mxu0
    %v411 = vadd.f32 %v311, %v410
    %v412 = vand.u32 %v77, 4294901760
    %v413 = vsub.f32 %v77, %v412
    %414 = vmatmul.f32.gmra.mxu0 %v413
    %v415 = vpop.f32.mrf.mxu0
    %v416 = vadd.f32 %v315, %v415
    %417 = vdwg.mxu0
    %418 = vmatpush.msra.mxu0 0.0
    %419 = vmatpush.msra.mxu0 0.0
    %420 = vmatpush.msra.mxu0 0.0
    %421 = vmatpush.msra.mxu0 0.0
    %422 = vmatpush.msra.mxu0 0.0
    %423 = vmatpush.msra.mxu0 0.0
    %424 = vmatpush.msra.mxu0 0.0
    %425 = vmatpush.msra.mxu0 0.0
    %426 = vmatpush.msra.mxu0 0.0
    %427 = vmatpush.msra.mxu0 0.0
    %428 = vmatpush.msra.mxu0 0.0
    %429 = vmatpush.msra.mxu0 0.0
    %430 = vmatpush.msra.mxu0 0.0
    %431 = vmatpush.msra.mxu0 0.0
    %v432 = vand.u32 %v29, 4294901760
    %433 = vmatpush.msra.mxu0 %v432
    %v434 = vand.u32 %v28, 4294901760
    %435 = vmatpush.msra.mxu0 %v434
    %v436 = vand.u32 %v32, 4294901760
    %v437 = vsub.f32 %v32, %v436
    %v438 = vand.u32 %v437, 4294901760
    %439 = vmatmul.f32.gmra.mxu0 %v438
    %v440 = vpop.f32.mrf.mxu0
    %v441 = vadd.f32 %v341, %v440
    %v442 = vand.u32 %v35, 4294901760
    %v443 = vsub.f32 %v35, %v442
    %v444 = vand.u32 %v443, 4294901760
    %445 = vmatmul.f32.gmra.mxu0 %v444
    %v446 = vpop.f32.mrf.mxu0
    %v447 = vadd.f32 %v346, %v446
    %v448 = vand.u32 %v38, 4294901760
    %v449 = vsub.f32 %v38, %v448
    %v450 = vand.u32 %v449, 4294901760
    %451 = vmatmul.f32.gmra.mxu0 %v450
    %v452 = vpop.f32.mrf.mxu0
    %v453 = vadd.f32 %v351, %v452
    %v454 = vand.u32 %v41, 4294901760
    %v455 = vsub.f32 %v41, %v454
    %v456 = vand.u32 %v455, 4294901760
    %457 = vmatmul.f32.gmra.mxu0 %v456
    %v458 = vpop.f32.mrf.mxu0
    %v459 = vadd.f32 %v356, %v458
    %v460 = vand.u32 %v44, 4294901760
    %v461 = vsub.f32 %v44, %v460
    %v462 = vand.u32 %v461, 4294901760
    %463 = vmatmul.f32.gmra.mxu0 %v462
    %v464 = vpop.f32.mrf.mxu0
    %v465 = vadd.f32 %v361, %v464
    %v466 = vand.u32 %v47, 4294901760
    %v467 = vsub.f32 %v47, %v466
    %v468 = vand.u32 %v467, 4294901760
    %469 = vmatmul.f32.gmra.mxu0 %v468
    %v470 = vpop.f32.mrf.mxu0
    %v471 = vadd.f32 %v366, %v470
    %v472 = vand.u32 %v50, 4294901760
    %v473 = vsub.f32 %v50, %v472
    %v474 = vand.u32 %v473, 4294901760
    %475 = vmatmul.f32.gmra.mxu0 %v474
    %v476 = vpop.f32.mrf.mxu0
    %v477 = vadd.f32 %v371, %v476
    %v478 = vand.u32 %v53, 4294901760
    %v479 = vsub.f32 %v53, %v478
    %v480 = vand.u32 %v479, 4294901760
    %481 = vmatmul.f32.gmra.mxu0 %v480
    %v482 = vpop.f32.mrf.mxu0
    %v483 = vadd.f32 %v376, %v482
    %v484 = vand.u32 %v56, 4294901760
    %v485 = vsub.f32 %v56, %v484
    %v486 = vand.u32 %v485, 4294901760
    %487 = vmatmul.f32.gmra.mxu0 %v486
    %v488 = vpop.f32.mrf.mxu0
    %v489 = vadd.f32 %v381, %v488
    %v490 = vand.u32 %v59, 4294901760
    %v491 = vsub.f32 %v59, %v490
    %v492 = vand.u32 %v491, 4294901760
    %493 = vmatmul.f32.gmra.mxu0 %v492
    %v494 = vpop.f32.mrf.mxu0
    %v495 = vadd.f32 %v386, %v494
    %v496 = vand.u32 %v62, 4294901760
    %v497 = vsub.f32 %v62, %v496
    %v498 = vand.u32 %v497, 4294901760
    %499 = vmatmul.f32.gmra.mxu0 %v498
    %v500 = vpop.f32.mrf.mxu0
    %v501 = vadd.f32 %v391, %v500
    %v502 = vand.u32 %v65, 4294901760
    %v503 = vsub.f32 %v65, %v502
    %v504 = vand.u32 %v503, 4294901760
    %505 = vmatmul.f32.gmra.mxu0 %v504
    %v506 = vpop.f32.mrf.mxu0
    %v507 = vadd.f32 %v396, %v506
    %v508 = vand.u32 %v68, 4294901760
    %v509 = vsub.f32 %v68, %v508
    %v510 = vand.u32 %v509, 4294901760
    %511 = vmatmul.f32.gmra.mxu0 %v510
    %v512 = vpop.f32.mrf.mxu0
    %v513 = vadd.f32 %v401, %v512
    %v514 = vand.u32 %v71, 4294901760
    %v515 = vsub.f32 %v71, %v514
    %v516 = vand.u32 %v515, 4294901760
    %517 = vmatmul.f32.gmra.mxu0 %v516
    %v518 = vpop.f32.mrf.mxu0
    %v519 = vadd.f32 %v406, %v518
    %v520 = vand.u32 %v74, 4294901760
    %v521 = vsub.f32 %v74, %v520
    %v522 = vand.u32 %v521, 4294901760
    %523 = vmatmul.f32.gmra.mxu0 %v522
    %v524 = vpop.f32.mrf.mxu0
    %v525 = vadd.f32 %v411, %v524
    %v526 = vand.u32 %v77, 4294901760
    %v527 = vsub.f32 %v77, %v526
    %v528 = vand.u32 %v527, 4294901760
    %529 = vmatmul.f32.gmra.mxu0 %v528
    %v530 = vpop.f32.mrf.mxu0
    %v531 = vadd.f32 %v416, %v530
    %532 = vdwg.mxu0
    %533 = vmatpush.msra.mxu0 0.0
    %534 = vmatpush.msra.mxu0 0.0
    %535 = vmatpush.msra.mxu0 0.0
    %536 = vmatpush.msra.mxu0 0.0
    %537 = vmatpush.msra.mxu0 0.0
    %538 = vmatpush.msra.mxu0 0.0
    %539 = vmatpush.msra.mxu0 0.0
    %540 = vmatpush.msra.mxu0 0.0
    %541 = vmatpush.msra.mxu0 0.0
    %542 = vmatpush.msra.mxu0 0.0
    %543 = vmatpush.msra.mxu0 0.0
    %544 = vmatpush.msra.mxu0 0.0
    %545 = vmatpush.msra.mxu0 0.0
    %546 = vmatpush.msra.mxu0 0.0
    %v547 = vand.u32 %v29, 4294901760
    %v548 = vsub.f32 %v29, %v547
    %v549 = vand.u32 %v548, 4294901760
    %550 = vmatpush.msra.mxu0 %v549
    %v551 = vand.u32 %v28, 4294901760
    %v552 = vsub.f32 %v28, %v551
    %v553 = vand.u32 %v552, 4294901760
    %554 = vmatpush.msra.mxu0 %v553
    %v555 = vand.u32 %v32, 4294901760
    %556 = vmatmul.f32.gmra.mxu0 %v555
    %v557 = vpop.f32.mrf.mxu0
    %v558 = vadd.f32 %v441, %v557
    %v559 = vand.u32 %v35, 4294901760
    %560 = vmatmul.f32.gmra.mxu0 %v559
    %v561 = vpop.f32.mrf.mxu0
    %v562 = vadd.f32 %v447, %v561
    %v563 = vand.u32 %v38, 4294901760
    %564 = vmatmul.f32.gmra.mxu0 %v563
    %v565 = vpop.f32.mrf.mxu0
    %v566 = vadd.f32 %v453, %v565
    %v567 = vand.u32 %v41, 4294901760
    %568 = vmatmul.f32.gmra.mxu0 %v567
    %v569 = vpop.f32.mrf.mxu0
    %v570 = vadd.f32 %v459, %v569
    %v571 = vand.u32 %v44, 4294901760
    %572 = vmatmul.f32.gmra.mxu0 %v571
    %v573 = vpop.f32.mrf.mxu0
    %v574 = vadd.f32 %v465, %v573
    %v575 = vand.u32 %v47, 4294901760
    %576 = vmatmul.f32.gmra.mxu0 %v575
    %v577 = vpop.f32.mrf.mxu0
    %v578 = vadd.f32 %v471, %v577
    %v579 = vand.u32 %v50, 4294901760
    %580 = vmatmul.f32.gmra.mxu0 %v579
    %v581 = vpop.f32.mrf.mxu0
    %v582 = vadd.f32 %v477, %v581
    %v583 = vand.u32 %v53, 4294901760
    %584 = vmatmul.f32.gmra.mxu0 %v583
    %v585 = vpop.f32.mrf.mxu0
    %v586 = vadd.f32 %v483, %v585
    %v587 = vand.u32 %v56, 4294901760
    %588 = vmatmul.f32.gmra.mxu0 %v587
    %v589 = vpop.f32.mrf.mxu0
    %v590 = vadd.f32 %v489, %v589
    %v591 = vand.u32 %v59, 4294901760
    %592 = vmatmul.f32.gmra.mxu0 %v591
    %v593 = vpop.f32.mrf.mxu0
    %v594 = vadd.f32 %v495, %v593
    %v595 = vand.u32 %v62, 4294901760
    %596 = vmatmul.f32.gmra.mxu0 %v595
    %v597 = vpop.f32.mrf.mxu0
    %v598 = vadd.f32 %v501, %v597
    %v599 = vand.u32 %v65, 4294901760
    %600 = vmatmul.f32.gmra.mxu0 %v599
    %v601 = vpop.f32.mrf.mxu0
    %v602 = vadd.f32 %v507, %v601
    %v603 = vand.u32 %v68, 4294901760
    %604 = vmatmul.f32.gmra.mxu0 %v603
    %v605 = vpop.f32.mrf.mxu0
    %v606 = vadd.f32 %v513, %v605
    %v607 = vand.u32 %v71, 4294901760
    %608 = vmatmul.f32.gmra.mxu0 %v607
    %v609 = vpop.f32.mrf.mxu0
    %v610 = vadd.f32 %v519, %v609
    %v611 = vand.u32 %v74, 4294901760
    %612 = vmatmul.f32.gmra.mxu0 %v611
    %v613 = vpop.f32.mrf.mxu0
    %v614 = vadd.f32 %v525, %v613
    %v615 = vand.u32 %v77, 4294901760
    %616 = vmatmul.f32.gmra.mxu0 %v615
    %v617 = vpop.f32.mrf.mxu0
    %v618 = vadd.f32 %v531, %v617
    %619 = vdwg.mxu0
    %620 = vmatpush.msra.mxu0 0.0
    %621 = vmatpush.msra.mxu0 0.0
    %622 = vmatpush.msra.mxu0 0.0
    %623 = vmatpush.msra.mxu0 0.0
    %624 = vmatpush.msra.mxu0 0.0
    %625 = vmatpush.msra.mxu0 0.0
    %626 = vmatpush.msra.mxu0 0.0
    %627 = vmatpush.msra.mxu0 0.0
    %628 = vmatpush.msra.mxu0 0.0
    %629 = vmatpush.msra.mxu0 0.0
    %630 = vmatpush.msra.mxu0 0.0
    %631 = vmatpush.msra.mxu0 0.0
    %632 = vmatpush.msra.mxu0 0.0
    %633 = vmatpush.msra.mxu0 0.0
    %v634 = vand.u32 %v29, 4294901760
    %635 = vmatpush.msra.mxu0 %v634
    %v636 = vand.u32 %v28, 4294901760
    %637 = vmatpush.msra.mxu0 %v636
    %v638 = vand.u32 %v32, 4294901760
    %639 = vmatmul.f32.gmra.mxu0 %v638
    %v640 = vpop.f32.mrf.mxu0
    %v641 = vadd.f32 %v558, %v640
    %v642 = vand.u32 %v35, 4294901760
    %643 = vmatmul.f32.gmra.mxu0 %v642
    %v644 = vpop.f32.mrf.mxu0
    %v645 = vadd.f32 %v562, %v644
    %v646 = vand.u32 %v38, 4294901760
    %647 = vmatmul.f32.gmra.mxu0 %v646
    %v648 = vpop.f32.mrf.mxu0
    %v649 = vadd.f32 %v566, %v648
    %v650 = vand.u32 %v41, 4294901760
    %651 = vmatmul.f32.gmra.mxu0 %v650
    %v652 = vpop.f32.mrf.mxu0
    %v653 = vadd.f32 %v570, %v652
    %v654 = vand.u32 %v44, 4294901760
    %655 = vmatmul.f32.gmra.mxu0 %v654
    %v656 = vpop.f32.mrf.mxu0
    %v657 = vadd.f32 %v574, %v656
    %v658 = vand.u32 %v47, 4294901760
    %659 = vmatmul.f32.gmra.mxu0 %v658
    %v660 = vpop.f32.mrf.mxu0
    %v661 = vadd.f32 %v578, %v660
    %v662 = vand.u32 %v50, 4294901760
    %663 = vmatmul.f32.gmra.mxu0 %v662
    %v664 = vpop.f32.mrf.mxu0
    %v665 = vadd.f32 %v582, %v664
    %v666 = vand.u32 %v53, 4294901760
    %667 = vmatmul.f32.gmra.mxu0 %v666
    %v668 = vpop.f32.mrf.mxu0
    %v669 = vadd.f32 %v586, %v668
    %v670 = vand.u32 %v56, 4294901760
    %671 = vmatmul.f32.gmra.mxu0 %v670
    %v672 = vpop.f32.mrf.mxu0
    %v673 = vadd.f32 %v590, %v672
    %v674 = vand.u32 %v59, 4294901760
    %675 = vmatmul.f32.gmra.mxu0 %v674
    %v676 = vpop.f32.mrf.mxu0
    %v677 = vadd.f32 %v594, %v676
    %v678 = vand.u32 %v62, 4294901760
    %679 = vmatmul.f32.gmra.mxu0 %v678
    %v680 = vpop.f32.mrf.mxu0
    %v681 = vadd.f32 %v598, %v680
    %v682 = vand.u32 %v65, 4294901760
    %683 = vmatmul.f32.gmra.mxu0 %v682
    %v684 = vpop.f32.mrf.mxu0
    %v685 = vadd.f32 %v602, %v684
    %v686 = vand.u32 %v68, 4294901760
    %687 = vmatmul.f32.gmra.mxu0 %v686
    %v688 = vpop.f32.mrf.mxu0
    %v689 = vadd.f32 %v606, %v688
    %v690 = vand.u32 %v71, 4294901760
    %691 = vmatmul.f32.gmra.mxu0 %v690
    %v692 = vpop.f32.mrf.mxu0
    %v693 = vadd.f32 %v610, %v692
    %v694 = vand.u32 %v74, 4294901760
    %695 = vmatmul.f32.gmra.mxu0 %v694
    %v696 = vpop.f32.mrf.mxu0
    %v697 = vadd.f32 %v614, %v696
    %v698 = vand.u32 %v77, 4294901760
    %699 = vmatmul.f32.gmra.mxu0 %v698
    %v700 = vpop.f32.mrf.mxu0
    %v701 = vadd.f32 %v618, %v700
    %702 = vdwg.mxu0
    %703 = vst [vmem:[#allocation2] sm:$0xff] %v641
    %704 = vst [vmem:[#allocation2 + $0x8] sm:$0xff] %v645
    %705 = vst [vmem:[#allocation2 + $0x10] sm:$0xff] %v649
    %706 = vst [vmem:[#allocation2 + $0x18] sm:$0xff] %v653
    %707 = vst [vmem:[#allocation2 + $0x20] sm:$0xff] %v657
    %708 = vst [vmem:[#allocation2 + $0x28] sm:$0xff] %v661
    %709 = vst [vmem:[#allocation2 + $0x30] sm:$0xff] %v665
    %710 = vst [vmem:[#allocation2 + $0x38] sm:$0xff] %v669
    %711 = vst [vmem:[#allocation2 + $0x40] sm:$0xff] %v673
    %712 = vst [vmem:[#allocation2 + $0x48] sm:$0xff] %v677
    %713 = vst [vmem:[#allocation2 + $0x50] sm:$0xff] %v681
    %714 = vst [vmem:[#allocation2 + $0x58] sm:$0xff] %v685
    %715 = vst [vmem:[#allocation2 + $0x60] sm:$0xff] %v689
    %716 = vst [vmem:[#allocation2 + $0x68] sm:$0xff] %v693
    %717 = vst [vmem:[#allocation2 + $0x70] sm:$0xff] %v697
    %718 = vst [vmem:[#allocation2 + $0x78] sm:$0xff] %v701
    // Predicated region
    $region10: #{tpu_custom_call.1} parent=1 // pred_check
      _
    $region11: #{tpu_custom_call.1} parent=1 // pred_check_branch
      %720 = sbr.rel (0) target = $region13
    $region12: #{tpu_custom_call.1} parent=1 // pred_region
      %722 = vsyncadd [#allocation3], 0
      %s723 = sshll.u32 [#allocation2], 4
      %s724 = int_to_ptr.vmem [resolvable:$true] %s723
      %s725 = sshll.u32 %s2, 4
      %s726 = int_to_ptr.hbm [resolvable:$true] %s725
      %731 = dma.vmem_to_hbm [thread:$0]  %s724, 2048, %s726, [#allocation3], 128, 128, 8
    $region13: #{tpu_custom_call.1} parent=1 // pred_fallthru
      _
    // Predicated region
    $region14: #{tpu_custom_call.1} parent=1 // pred_check
      _
    $region15: #{tpu_custom_call.1} parent=1 // pred_check_branch
      %733 = sbr.rel (0) target = $region17
    $region16: #{tpu_custom_call.1} parent=1 // pred_region
      %735 = dma.done [#allocation3], 2048
    $region17: #{tpu_custom_call.1} parent=1 // pred_fallthru
      _
    %736 = vsyncpa [#allocation3], 1

</llo_original>
